<compile_context>
chip_gen: v7x
topology: tpu7x:2x2x1
jax: 0.10.0
libtpu: 0.0.40
codegen_flags: <defaults>
</compile_context>

<pallas_src>
import jax
import jax.numpy as jnp
from jax.experimental import pallas as pl
from jax.experimental.pallas import tpu as pltpu


def _attention_logits_kernel(z_ref, w1_ref, b1_ref, w2_ref, o_ref):
    # z_ref : (TILE_N, in_size)  bf16/f32   (pipelined tile of z)
    # w1_ref: (in_size, H)       bf16/f32   (resident across grid steps)
    # b1_ref: (1, H)             f32
    # w2_ref: (H, 1)             f32
    # o_ref : (1, TILE_N)        f32        (lane-dense logits)

    # Linear(in_size, hidden) on the MXU with f32 accumulation, Tanh on EUP.
    h = jnp.tanh(
        jnp.dot(z_ref[...], w1_ref[...], preferred_element_type=jnp.float32)
        + b1_ref[...]
    )                                                  # (TILE_N, H) f32

    # Linear(hidden, 1) off the MXU: transpose the small h tile via the XLU,
    # then VPU broadcast-mul + sublane reduce -> lane-dense (1, TILE_N) scores.
    h_t = h.T                                          # (H, TILE_N)
    o_ref[...] = jnp.sum(h_t * w2_ref[...], axis=0, keepdims=True)


def _default_tile_n(in_size, itemsize):
    """Pick a tile over N targeting ~2 MiB of z per grid step."""
    target_bytes = 2 * 1024 * 1024
    t = target_bytes // max(1, in_size * itemsize)
    t = (t // 128) * 128
    return int(max(256, min(8192, t)))


def attention_forward(z, w1_t, b1, w2_t, b2, *, tile_n=None,
                      compute_dtype=jnp.bfloat16):
    """FG-CF Attention forward pass.

    z    : (N, in_size)
    w1_t : (in_size, hidden)   (torch Linear weight transposed to (in, out))
    b1   : (hidden,) or (1, hidden)
    w2_t : (hidden, 1)
    b2   : scalar-like ((), (1,), or (1, 1))
    Returns beta = squeeze(softmax(project(z), dim=0)) of shape (N,).
    """
    N, in_size = z.shape
    H = w1_t.shape[1]

    # bf16 at the boundary halves the dominant HBM read of z; in a real model
    # z would typically already be bf16 so this cast fuses upstream.
    z_c = z.astype(compute_dtype)
    w1_c = jnp.asarray(w1_t).astype(compute_dtype)
    b1_r = jnp.asarray(b1, jnp.float32).reshape(1, H)
    w2_c = jnp.asarray(w2_t, jnp.float32).reshape(H, 1)

    if tile_n is None:
        tile_n = _default_tile_n(in_size, jnp.dtype(compute_dtype).itemsize)

    # Tile the N axis.  Small N -> single full block (always layout-legal);
    # otherwise tiles must be a multiple of 128 so output blocks stay
    # lane-dense and z blocks stay (8,128)-aligned.
    if N <= tile_n:
        tile_n = N
    else:
        assert tile_n % 128 == 0, "tile_n must be a multiple of 128"
    grid = (pl.cdiv(N, tile_n),)

    cost = pl.CostEstimate(
        flops=2 * N * in_size * H + 2 * N * H,
        transcendentals=N * H,
        bytes_accessed=(z_c.size * z_c.dtype.itemsize
                        + w1_c.size * w1_c.dtype.itemsize
                        + 4 * (b1_r.size + w2_c.size + N)),
    )

    logits = pl.pallas_call(
        _attention_logits_kernel,
        out_shape=jax.ShapeDtypeStruct((1, N), jnp.float32),
        grid=grid,
        in_specs=[
            pl.BlockSpec((tile_n, in_size), lambda i: (i, 0)),  # z tiles (pipelined)
            pl.BlockSpec((in_size, H), lambda i: (0, 0)),       # weights stay resident
            pl.BlockSpec((1, H), lambda i: (0, 0)),
            pl.BlockSpec((H, 1), lambda i: (0, 0)),
        ],
        out_specs=pl.BlockSpec((1, tile_n), lambda i: (0, i)),  # lane-dense logits
        compiler_params=pltpu.CompilerParams(
            dimension_semantics=("parallel",),  # independent tiles; v7x 2-TC split
        ),
        cost_estimate=cost,
    )(z_c, w1_c, b1_r, w2_c)

    # Softmax over the N axis (torch dim=0) on the tiny (N,) vector in plain
    # JAX: exact global normalization; b2 kept for faithfulness (it is a
    # constant shift, so softmax-invariant).
    w = logits[0] + jnp.asarray(b2, jnp.float32).reshape(())
    return jax.nn.softmax(w, axis=0)


def init_params(key, in_size, hidden_size=8):
    """Deterministic init mimicking nn.Linear's U(-1/sqrt(fan_in), 1/sqrt(fan_in))."""
    k1, k2, k3, k4 = jax.random.split(key, 4)
    bound1 = 1.0 / jnp.sqrt(in_size)
    bound2 = 1.0 / jnp.sqrt(hidden_size)
    # stored already transposed to (in, out) for the kernel (torch Linear is (out, in))
    w1_t = jax.random.uniform(k1, (in_size, hidden_size), jnp.float32, -bound1, bound1)
    b1 = jax.random.uniform(k2, (1, hidden_size), jnp.float32, -bound1, bound1)
    w2_t = jax.random.uniform(k3, (hidden_size, 1), jnp.float32, -bound2, bound2)
    b2 = jax.random.uniform(k4, (1, 1), jnp.float32, -bound2, bound2)
    return w1_t, b1, w2_t, b2


def _reference(z, w1_t, b1, w2_t, b2, compute_dtype=jnp.bfloat16):
    """Pure-JAX reference with the same bf16 compute dtype (f32 accumulation)."""
    z_c = z.astype(compute_dtype)
    w1_c = jnp.asarray(w1_t).astype(compute_dtype)
    h = jnp.tanh(jnp.dot(z_c, w1_c, preferred_element_type=jnp.float32)
                 + jnp.asarray(b1, jnp.float32).reshape(1, -1))
    w = h @ jnp.asarray(w2_t, jnp.float32) + jnp.asarray(b2, jnp.float32).reshape(())
    return jnp.squeeze(jax.nn.softmax(w, axis=0))


if __name__ == "__main__":
    N, in_size, hidden = 1024, 32, 8
    key = jax.random.PRNGKey(0)
    kz, kp = jax.random.split(key)
    z = jax.random.normal(kz, (N, in_size), jnp.float32)
    w1_t, b1, w2_t, b2 = init_params(kp, in_size, hidden)

    beta_ref = _reference(z, w1_t, b1, w2_t, b2)

    # 1) Multi-tile pipelined path: tile_n=256 -> 4 grid steps.
    beta_tiled = jax.block_until_ready(
        attention_forward(z, w1_t, b1, w2_t, b2, tile_n=256))
    # 2) Default adaptive tile (single block here since N is small).
    beta_auto = jax.block_until_ready(
        attention_forward(z, w1_t, b1, w2_t, b2))

    for beta in (beta_tiled, beta_auto):
        assert beta.shape == (N,)
        assert jnp.allclose(beta, beta_ref, atol=1e-5, rtol=1e-4), float(
            jnp.max(jnp.abs(beta - beta_ref)))
        assert jnp.allclose(jnp.sum(beta), 1.0, atol=1e-5)

    print("KERNEL_OK")
</pallas_src>

<mosaic_0001>
module attributes {stable_mosaic.version = 11 : i64} {
  func.func @_attention_logits_kernel(%arg0: i32, %arg1: memref<256x32xbf16, #tpu.memory_space<vmem>>, %arg2: memref<32x8xbf16, #tpu.memory_space<vmem>>, %arg3: memref<1x8xf32, #tpu.memory_space<vmem>>, %arg4: memref<8x1xf32, #tpu.memory_space<vmem>>, %arg5: memref<1x256xf32, #tpu.memory_space<vmem>>) attributes {dimension_semantics = [#tpu.dimension_semantics<parallel>], iteration_bounds = array<i64: 4>, scalar_prefetch = 0 : i64, scratch_operands = 0 : i64, tpu.core_type = #tpu.core_type<tc>, window_params = [{transform_indices = @transform_0, window_bounds = array<i64: 256, 32>}, {pipeline_mode = #tpu.pipeline_mode<synchronous>, transform_indices = @transform_1, window_bounds = array<i64: 32, 8>}, {pipeline_mode = #tpu.pipeline_mode<synchronous>, transform_indices = @transform_2, window_bounds = array<i64: 1, 8>}, {pipeline_mode = #tpu.pipeline_mode<synchronous>, transform_indices = @transform_3, window_bounds = array<i64: 8, 1>}, {transform_indices = @transform_4, window_bounds = array<i64: 1, 256>}]} {
    %c0 = arith.constant 0 : index
    %c0_0 = arith.constant 0 : index
    %0 = vector.load %arg1[%c0, %c0_0] : memref<256x32xbf16, #tpu.memory_space<vmem>>, vector<256x32xbf16>
    %c0_1 = arith.constant 0 : index
    %c0_2 = arith.constant 0 : index
    %1 = vector.load %arg2[%c0_1, %c0_2] : memref<32x8xbf16, #tpu.memory_space<vmem>>, vector<32x8xbf16>
    %cst = arith.constant dense<0.000000e+00> : vector<256x8xf32>
    %2 = tpu.matmul %0, %1, %cst {dimension_numbers = #tpu.dot_dimension_numbers<[1], [0], [0], [1], [0, 0, 1, 1], [], []>} : vector<256x32xbf16>, vector<32x8xbf16>, vector<256x8xf32> -> vector<256x8xf32>
    %c0_3 = arith.constant 0 : index
    %c0_4 = arith.constant 0 : index
    %3 = vector.load %arg3[%c0_3, %c0_4] : memref<1x8xf32, #tpu.memory_space<vmem>>, vector<1x8xf32>
    %4 = vector.broadcast %3 : vector<1x8xf32> to vector<256x8xf32>
    %5 = arith.addf %2, %4 : vector<256x8xf32>
    %6 = math.tanh %5 : vector<256x8xf32>
    %7 = tpu.transpose %6, [1, 0] : vector<256x8xf32> -> vector<8x256xf32>
    %c0_5 = arith.constant 0 : index
    %c0_6 = arith.constant 0 : index
    %8 = vector.load %arg4[%c0_5, %c0_6] : memref<8x1xf32, #tpu.memory_space<vmem>>, vector<8x1xf32>
    %9 = vector.broadcast %8 : vector<8x1xf32> to vector<8x256xf32>
    %10 = arith.mulf %7, %9 : vector<8x256xf32>
    %cst_7 = arith.constant dense<0.000000e+00> : vector<256xf32>
    %11 = vector.multi_reduction <add>, %10, %cst_7 [0] : vector<8x256xf32> to vector<256xf32>
    %12 = vector.shape_cast %11 : vector<256xf32> to vector<1x256xf32>
    %c0_8 = arith.constant 0 : index
    %c0_9 = arith.constant 0 : index
    %13 = vector.load %arg5[%c0_8, %c0_9] : memref<1x256xf32, #tpu.memory_space<vmem>>, vector<1x256xf32>
    tpu.vector_store %arg5[%c0_8, %c0_9], %12 {strides = array<i32>} : memref<1x256xf32, #tpu.memory_space<vmem>>, vector<1x256xf32>,
    return
  }
  func.func @transform_0(%arg0: i32) -> (i32, i32) {
    %c0_i32 = arith.constant 0 : i32
    %c0_i32_0 = arith.constant 0 : i32
    return %arg0, %c0_i32 : i32, i32
  }
  func.func @transform_1(%arg0: i32) -> (i32, i32) {
    %c0_i32 = arith.constant 0 : i32
    %c0_i32_0 = arith.constant 0 : i32
    %c0_i32_1 = arith.constant 0 : i32
    return %c0_i32, %c0_i32_0 : i32, i32
  }
  func.func @transform_2(%arg0: i32) -> (i32, i32) {
    %c0_i32 = arith.constant 0 : i32
    %c0_i32_0 = arith.constant 0 : i32
    %c0_i32_1 = arith.constant 0 : i32
    return %c0_i32, %c0_i32_0 : i32, i32
  }
  func.func @transform_3(%arg0: i32) -> (i32, i32) {
    %c0_i32 = arith.constant 0 : i32
    %c0_i32_0 = arith.constant 0 : i32
    %c0_i32_1 = arith.constant 0 : i32
    return %c0_i32, %c0_i32_0 : i32, i32
  }
  func.func @transform_4(%arg0: i32) -> (i32, i32) {
    %c0_i32 = arith.constant 0 : i32
    %c0_i32_0 = arith.constant 0 : i32
    return %c0_i32, %arg0 : i32, i32
  }
}

</mosaic_0001>

<llo_original>
// kernel: tpu_custom_call.1
$region0: #{tpu_custom_call.1}
  #allocation0 [shape = 'u32[]', space=smem, size = 0x4, offset = 0x4, fixed_abs, tag = 'smem constant byte address 0x4 - core index']
  #allocation1 [shape = 'u32[144,128]{1,0:T(1,128)}', space=vmem, size = 0x12000, scoped, tag = 'internal scratch']
  %s0 = inlined_call_operand.vmem [shape: bf16[1024,32], index: 0, kind: input, shape index: {}]
  %s1 = inlined_call_operand.vmem [shape: bf16[32,8], index: 1, kind: input, shape index: {}]
  %s2 = inlined_call_operand.vmem [shape: f32[1,8], index: 2, kind: input, shape index: {}]
  %s3 = inlined_call_operand.vmem [shape: f32[8,1], index: 3, kind: input, shape index: {}]
  %s4 = inlined_call_operand.hbm [shape: f32[1,1024], index: 4, kind: output, shape index: {}]
  %s5 = sld [smem:[#allocation0]]
  $region49: #{tpu_custom_call.1} parent=0
    _
  %s7 = ssub.s32 1, %s5
  %s8 = scalar_select 0, %s7, %s5
  $region1: #{tpu_custom_call.1} parent=0
    #allocation2 [shape = 'u8[2048]{0}', space=vmem, size = 0x800, scoped, tag = 'output window, operand 0']
    #allocation3 [shape = 's32[2]{0}', space=sflag, size = 0x8, scoped, tag = 'scoped memory for tpu_custom_call.1']
    %9 = vsyncpa [#allocation3], 0
    %s10 = scalar_lea.sflag [#allocation3], 1
    %11 = vsyncpa %s10, 0
    loop: start=0, step=1, limit=6
    $region2: #{tpu_custom_call.1} parent=1 // loop_pre_header
      _
    $region3: #{tpu_custom_call.1} parent=1 // loop_header
      %s13 = sphi 0, %s17
      %p14 = scmp.ge.s32.totalorder %s13, 6
      %s23 = sphi 0, %s25
      %s26 = sphi 0, %s23
      %s27 = sphi 0, %s26
      %s43 = sphi 0, %s27
      %s47 = sphi 0, %s47
      %s49 = sphi 0, %s47
      %s50 = sphi 0, %s49
      %s64 = sphi 0, %s50
      %s68 = sphi 0, %s68
      %s70 = sphi 0, %s68
      %s71 = sphi 0, %s70
      %s85 = sphi 0, %s71
      %s89 = sphi 0, %s89
      %s91 = sphi 0, %s89
      %s92 = sphi 0, %s91
      %s106 = sphi 0, %s92
      %s112 = sphi 0, %s114
      %s115 = sphi 0, %s112
      %s116 = sphi 0, %s115
      %s132 = sphi 0, %s116
    $region4: #{tpu_custom_call.1} parent=1 // loop_header_branch
      %16 = sbr.rel (%p14) target = $region8
    $region5: #{tpu_custom_call.1} parent=1 // loop_body
      %s18 = ssub.s32 %s13, 1
      %s19 = ssub.s32 %s13, 2
      %s20 = sadd.s32 %s13, 1
      %s21 = ssub.s32 %s13, %s20
      %p22 = scmp.eq.s32.totalorder %s21, 0
      %s24 = sadd.s32 %s23, 1
      %s25 = scalar_select %p22, %s23, %s24
      %p28 = pneg %p22
      %p29 = scmp.eq.s32.totalorder %s13, 3
      %p30 = por %p28, %p29
      %p31 = scmp.ne.s32.totalorder %s23, %s26
      %p32 = scmp.eq.s32.totalorder %s13, 0
      %p33 = por %p31, %p32
      %p34 = scmp.ne.s32.totalorder %s23, %s26
      %p35 = scmp.eq.s32.totalorder %s18, 3
      %p36 = por %p34, %p35
      %p37 = scmp.ne.s32.totalorder %s26, %s27
      %p38 = scmp.eq.s32.totalorder %s18, 0
      %p39 = por %p37, %p38
      %p40 = scmp.ne.s32.totalorder %s26, %s27
      %p41 = scmp.eq.s32.totalorder %s19, 3
      %p42 = por %p40, %p41
      %p44 = scmp.ne.s32.totalorder %s27, %s43
      %p45 = scmp.eq.s32.totalorder %s19, 0
      %p46 = por %p44, %p45
      %s48 = sadd.s32 %s47, 1
      %p51 = scmp.eq.s32.totalorder %s13, 3
      %p52 = scmp.ne.s32.totalorder %s47, %s49
      %p53 = scmp.eq.s32.totalorder %s13, 0
      %p54 = por %p52, %p53
      %p55 = scmp.ne.s32.totalorder %s47, %s49
      %p56 = scmp.eq.s32.totalorder %s18, 3
      %p57 = por %p55, %p56
      %p58 = scmp.ne.s32.totalorder %s49, %s50
      %p59 = scmp.eq.s32.totalorder %s18, 0
      %p60 = por %p58, %p59
      %p61 = scmp.ne.s32.totalorder %s49, %s50
      %p62 = scmp.eq.s32.totalorder %s19, 3
      %p63 = por %p61, %p62
      %p65 = scmp.ne.s32.totalorder %s50, %s64
      %p66 = scmp.eq.s32.totalorder %s19, 0
      %p67 = por %p65, %p66
      %s69 = sadd.s32 %s68, 1
      %p72 = scmp.eq.s32.totalorder %s13, 3
      %p73 = scmp.ne.s32.totalorder %s68, %s70
      %p74 = scmp.eq.s32.totalorder %s13, 0
      %p75 = por %p73, %p74
      %p76 = scmp.ne.s32.totalorder %s68, %s70
      %p77 = scmp.eq.s32.totalorder %s18, 3
      %p78 = por %p76, %p77
      %p79 = scmp.ne.s32.totalorder %s70, %s71
      %p80 = scmp.eq.s32.totalorder %s18, 0
      %p81 = por %p79, %p80
      %p82 = scmp.ne.s32.totalorder %s70, %s71
      %p83 = scmp.eq.s32.totalorder %s19, 3
      %p84 = por %p82, %p83
      %p86 = scmp.ne.s32.totalorder %s71, %s85
      %p87 = scmp.eq.s32.totalorder %s19, 0
      %p88 = por %p86, %p87
      %s90 = sadd.s32 %s89, 1
      %p93 = scmp.eq.s32.totalorder %s13, 3
      %p94 = scmp.ne.s32.totalorder %s89, %s91
      %p95 = scmp.eq.s32.totalorder %s13, 0
      %p96 = por %p94, %p95
      %p97 = scmp.ne.s32.totalorder %s89, %s91
      %p98 = scmp.eq.s32.totalorder %s18, 3
      %p99 = por %p97, %p98
      %p100 = scmp.ne.s32.totalorder %s91, %s92
      %p101 = scmp.eq.s32.totalorder %s18, 0
      %p102 = por %p100, %p101
      %p103 = scmp.ne.s32.totalorder %s91, %s92
      %p104 = scmp.eq.s32.totalorder %s19, 3
      %p105 = por %p103, %p104
      %p107 = scmp.ne.s32.totalorder %s92, %s106
      %p108 = scmp.eq.s32.totalorder %s19, 0
      %p109 = por %p107, %p108
      %s110 = ssub.s32 %s13, %s20
      %p111 = scmp.eq.s32.totalorder %s110, 0
      %s113 = sadd.s32 %s112, 1
      %s114 = scalar_select %p111, %s112, %s113
      %p117 = pneg %p111
      %p118 = scmp.eq.s32.totalorder %s13, 3
      %p119 = por %p117, %p118
      %p120 = scmp.ne.s32.totalorder %s112, %s115
      %p121 = scmp.eq.s32.totalorder %s13, 0
      %p122 = por %p120, %p121
      %p123 = scmp.ne.s32.totalorder %s112, %s115
      %p124 = scmp.eq.s32.totalorder %s18, 3
      %p125 = por %p123, %p124
      %p126 = scmp.ne.s32.totalorder %s115, %s116
      %p127 = scmp.eq.s32.totalorder %s18, 0
      %p128 = por %p126, %p127
      %p129 = scmp.ne.s32.totalorder %s115, %s116
      %p130 = scmp.eq.s32.totalorder %s19, 3
      %p131 = por %p129, %p130
      %p133 = scmp.ne.s32.totalorder %s116, %s132
      %p134 = scmp.eq.s32.totalorder %s19, 0
      %p135 = por %p133, %p134
      %p136 = scmp.le.s32.totalorder 1, %s13
      %p137 = scmp.lt.s32.totalorder %s13, 5
      %p138 = pnand %p136, %p137
      %p139 = pneg %p138
      // Predicated region
      $region9: #{tpu_custom_call.1} parent=5 // pred_check
        _
      $region10: #{tpu_custom_call.1} parent=5 // pred_check_branch
        %141 = sbr.rel (%p138) target = $region12
      $region11: #{tpu_custom_call.1} parent=5 // pred_region
        %s142 = ssub.s32 %s13, 1
        // Predicated region
        $region13: #{tpu_custom_call.1} parent=11 // pred_check
          %p143 = pneg %p60
        $region14: #{tpu_custom_call.1} parent=11 // pred_check_branch
          %145 = sbr.rel (%p143) target = $region16
        $region15: #{tpu_custom_call.1} parent=11 // pred_region
          _
        $region16: #{tpu_custom_call.1} parent=11 // pred_fallthru
          _
        // Predicated region
        $region17: #{tpu_custom_call.1} parent=11 // pred_check
          %p146 = pneg %p81
        $region18: #{tpu_custom_call.1} parent=11 // pred_check_branch
          %148 = sbr.rel (%p146) target = $region20
        $region19: #{tpu_custom_call.1} parent=11 // pred_region
          _
        $region20: #{tpu_custom_call.1} parent=11 // pred_fallthru
          _
        // Predicated region
        $region21: #{tpu_custom_call.1} parent=11 // pred_check
          %p149 = pneg %p102
        $region22: #{tpu_custom_call.1} parent=11 // pred_check_branch
          %151 = sbr.rel (%p149) target = $region24
        $region23: #{tpu_custom_call.1} parent=11 // pred_region
          _
        $region24: #{tpu_custom_call.1} parent=11 // pred_fallthru
          _
      $region12: #{tpu_custom_call.1} parent=5 // pred_fallthru
        _
      %p152 = scmp.lt.s32.totalorder %s13, 4
      // Predicated region
      $region25: #{tpu_custom_call.1} parent=5 // pred_check
        %p153 = pneg %p152
      $region26: #{tpu_custom_call.1} parent=5 // pred_check_branch
        %155 = sbr.rel (%p153) target = $region28
      $region27: #{tpu_custom_call.1} parent=5 // pred_region
        // Predicated region
        $region29: #{tpu_custom_call.1} parent=27 // pred_check
          %p156 = pneg %p33
        $region30: #{tpu_custom_call.1} parent=27 // pred_check_branch
          %158 = sbr.rel (%p156) target = $region32
        $region31: #{tpu_custom_call.1} parent=27 // pred_region
          %s159 = smul.u32 32, %s13
          %p160 = scmp.lt.s32.totalorder %s159, 127
          %s161 = scalar_select %p160, %s159, 127
          %s162 = smul.addr %s161, 4
          %s163 = scalar_lea.vmem %s0, %s162
          %s164 = smul.u32 32, %s13
        $region32: #{tpu_custom_call.1} parent=27 // pred_fallthru
          _
      $region28: #{tpu_custom_call.1} parent=5 // pred_fallthru
        _
      %p165 = scmp.le.s32.totalorder 1, %s13
      %p166 = scmp.lt.s32.totalorder %s13, 5
      %p167 = pnand %p165, %p166
      %p168 = pneg %p167
      // Predicated region
      $region33: #{tpu_custom_call.1} parent=5 // pred_check
        _
      $region34: #{tpu_custom_call.1} parent=5 // pred_check_branch
        %170 = sbr.rel (%p167) target = $region36
      $region35: #{tpu_custom_call.1} parent=5 // pred_region
        %s171 = ssub.s32 %s13, 1
        %s172 = smul.u32 32, %s18
        %p173 = scmp.lt.s32.totalorder %s172, 127
        %s174 = scalar_select %p173, %s172, 127
        %s175 = smul.addr %s174, 4
        %s176 = scalar_lea.vmem %s0, %s175
        %p177 = pneg %p39
        %p178 = pneg %p36
        %p179 = pneg %p60
        %p180 = pneg %p57
        %p181 = pneg %p81
        %p182 = pneg %p78
        %p183 = pneg %p102
        %p184 = pneg %p99
        %p185 = pneg %p128
        %p186 = pneg %p125
        %s187 = sand.u32 %s115, 1
        %s188 = scalar_lea.sflag [#allocation3], %s187
        %s189 = sand.u32 %s115, 1
        %s190 = smul.addr %s189, 2
        %s191 = scalar_lea.vmem [#allocation2], %s190
        %s192 = smul.u32 32, %s18
        %p193 = scmp.lt.s32.totalorder %s192, 127
        %s194 = scalar_select %p193, %s192, 127
        %s195 = smul.addr %s194, 4
        %s196 = scalar_lea.vmem %s0, %s195
        %s197 = smul.u32 32, %s18
        %s198 = smul.u32 2, %s18
        %v200 = vld [vmem:[%s196] sm:$0xf]
        %v201 = vld [vmem:[%s196 + $0x4] sm:$0xf]
        %v202 = vld [vmem:[%s196 + $0x8] sm:$0xf]
        %v203 = vld [vmem:[%s196 + $0xc] sm:$0xf]
        %v204 = vld [vmem:[%s196 + $0x10] sm:$0xf]
        %v205 = vld [vmem:[%s196 + $0x14] sm:$0xf]
        %v206 = vld [vmem:[%s196 + $0x18] sm:$0xf]
        %v207 = vld [vmem:[%s196 + $0x1c] sm:$0xf]
        %v208 = vld [vmem:[%s196 + $0x20] sm:$0xf]
        %v209 = vld [vmem:[%s196 + $0x24] sm:$0xf]
        %v210 = vld [vmem:[%s196 + $0x28] sm:$0xf]
        %v211 = vld [vmem:[%s196 + $0x2c] sm:$0xf]
        %v212 = vld [vmem:[%s196 + $0x30] sm:$0xf]
        %v213 = vld [vmem:[%s196 + $0x34] sm:$0xf]
        %v214 = vld [vmem:[%s196 + $0x38] sm:$0xf]
        %v215 = vld [vmem:[%s196 + $0x3c] sm:$0xf]
        %v216 = vld [vmem:[%s196 + $0x40] sm:$0xf]
        %v217 = vld [vmem:[%s196 + $0x44] sm:$0xf]
        %v218 = vld [vmem:[%s196 + $0x48] sm:$0xf]
        %v219 = vld [vmem:[%s196 + $0x4c] sm:$0xf]
        %v220 = vld [vmem:[%s196 + $0x50] sm:$0xf]
        %v221 = vld [vmem:[%s196 + $0x54] sm:$0xf]
        %v222 = vld [vmem:[%s196 + $0x58] sm:$0xf]
        %v223 = vld [vmem:[%s196 + $0x5c] sm:$0xf]
        %v224 = vld [vmem:[%s196 + $0x60] sm:$0xf]
        %v225 = vld [vmem:[%s196 + $0x64] sm:$0xf]
        %v226 = vld [vmem:[%s196 + $0x68] sm:$0xf]
        %v227 = vld [vmem:[%s196 + $0x6c] sm:$0xf]
        %v228 = vld [vmem:[%s196 + $0x70] sm:$0xf]
        %v229 = vld [vmem:[%s196 + $0x74] sm:$0xf]
        %v230 = vld [vmem:[%s196 + $0x78] sm:$0xf]
        %v231 = vld [vmem:[%s196 + $0x7c] sm:$0xf]
        %v232 = vld [vmem:[%s1] sm:$0xf]
        %v233 = vld [vmem:[%s1 + $0x4] sm:$0xf]
        %v234 = vld [vmem:[%s1 + $0x8] sm:$0xf]
        %v235 = vld [vmem:[%s1 + $0xc] sm:$0xf]
        %v236 = vld [vmem:[%s2] sm:$0x1]
        %v238 = vlaneseq
        %v239 = vshrl.u32 %v238, 7
        %v240 = vsub.s32 0, %v239
        %v241 = vrot.slane %v236, %v240
        %v275 = vunpack.c.l.b16 %v200
        %v276 = vunpack.c.l.b16 %v201
        %v277 = vunpack.c.l.b16 %v202
        %v278 = vunpack.c.l.b16 %v203
        %v279 = vunpack.c.l.b16 %v204
        %v280 = vunpack.c.l.b16 %v205
        %v281 = vunpack.c.l.b16 %v206
        %v282 = vunpack.c.l.b16 %v207
        %v283 = vunpack.c.l.b16 %v208
        %v284 = vunpack.c.l.b16 %v209
        %v285 = vunpack.c.l.b16 %v210
        %v286 = vunpack.c.l.b16 %v211
        %v287 = vunpack.c.l.b16 %v212
        %v288 = vunpack.c.l.b16 %v213
        %v289 = vunpack.c.l.b16 %v214
        %v290 = vunpack.c.l.b16 %v215
        %v291 = vunpack.c.l.b16 %v216
        %v292 = vunpack.c.l.b16 %v217
        %v293 = vunpack.c.l.b16 %v218
        %v294 = vunpack.c.l.b16 %v219
        %v295 = vunpack.c.l.b16 %v220
        %v296 = vunpack.c.l.b16 %v221
        %v297 = vunpack.c.l.b16 %v222
        %v298 = vunpack.c.l.b16 %v223
        %v299 = vunpack.c.l.b16 %v224
        %v300 = vunpack.c.l.b16 %v225
        %v301 = vunpack.c.l.b16 %v226
        %v302 = vunpack.c.l.b16 %v227
        %v303 = vunpack.c.l.b16 %v228
        %v304 = vunpack.c.l.b16 %v229
        %v305 = vunpack.c.l.b16 %v230
        %v306 = vunpack.c.l.b16 %v231
        %v307 = vpack.c.b16 %v276, %v275
        %v308 = vpack.c.b16 %v278, %v277
        %v309 = vpack.c.b16 %v280, %v279
        %v310 = vpack.c.b16 %v282, %v281
        %v311 = vpack.c.b16 %v284, %v283
        %v312 = vpack.c.b16 %v286, %v285
        %v313 = vpack.c.b16 %v288, %v287
        %v314 = vpack.c.b16 %v290, %v289
        %v315 = vpack.c.b16 %v292, %v291
        %v316 = vpack.c.b16 %v294, %v293
        %v317 = vpack.c.b16 %v296, %v295
        %v318 = vpack.c.b16 %v298, %v297
        %v319 = vpack.c.b16 %v300, %v299
        %v320 = vpack.c.b16 %v302, %v301
        %v321 = vpack.c.b16 %v304, %v303
        %v322 = vpack.c.b16 %v306, %v305
        %v327 = vunpack.c.l.b16 %v232
        %v328 = vunpack.c.l.b16 %v233
        %v329 = vunpack.c.l.b16 %v234
        %v330 = vunpack.c.l.b16 %v235
        %v331 = vpack.c.b16 %v328, %v327
        %v332 = vpack.c.b16 %v330, %v329
        %vm335 = vcmask 261120
        %v337 = vsel %vm335, %v307, 0
        %v340 = vsel %vm335, %v308, 0
        %v343 = vsel %vm335, %v309, 0
        %v346 = vsel %vm335, %v310, 0
        %v349 = vsel %vm335, %v311, 0
        %v352 = vsel %vm335, %v312, 0
        %v355 = vsel %vm335, %v313, 0
        %v358 = vsel %vm335, %v314, 0
        %v361 = vsel %vm335, %v315, 0
        %v364 = vsel %vm335, %v316, 0
        %v367 = vsel %vm335, %v317, 0
        %v370 = vsel %vm335, %v318, 0
        %v373 = vsel %vm335, %v319, 0
        %v376 = vsel %vm335, %v320, 0
        %v379 = vsel %vm335, %v321, 0
        %v382 = vsel %vm335, %v322, 0
        %384 = vmatprep.subr.bf16.mxu0 0
        %385 = vmatpush1.bf16.msra.mxu0 %v331
        %386 = vmatprep.subr.bf16.mxu0 0
        %387 = vmatpush1.bf16.msra.mxu0 %v332
        %388 = vmatprep.subr.bf16.mxu0 0
        %389 = vmatpush1.bf16.msra.mxu0 0
        %390 = vmatprep.subr.bf16.mxu0 0
        %391 = vmatpush1.bf16.msra.mxu0 0
        %392 = vmatprep.subr.bf16.mxu0 0
        %393 = vmatpush1.bf16.msra.mxu0 0
        %394 = vmatprep.subr.bf16.mxu0 0
        %395 = vmatpush1.bf16.msra.mxu0 0
        %396 = vmatprep.subr.bf16.mxu0 0
        %397 = vmatpush1.bf16.msra.mxu0 0
        %398 = vmatprep.subr.bf16.mxu0 0
        %399 = vmatpush1.bf16.msra.mxu0 0
        %400 = vmatprep.subr.bf16.mxu0 0
        %401 = vmatpush1.bf16.msra.mxu0 0
        %402 = vmatprep.subr.bf16.mxu0 0
        %403 = vmatpush1.bf16.msra.mxu0 0
        %404 = vmatprep.subr.bf16.mxu0 0
        %405 = vmatpush1.bf16.msra.mxu0 0
        %406 = vmatprep.subr.bf16.mxu0 0
        %407 = vmatpush1.bf16.msra.mxu0 0
        %408 = vmatprep.subr.bf16.mxu0 0
        %409 = vmatpush1.bf16.msra.mxu0 0
        %410 = vmatprep.subr.bf16.mxu0 0
        %411 = vmatpush1.bf16.msra.mxu0 0
        %412 = vmatprep.subr.bf16.mxu0 0
        %413 = vmatpush1.bf16.msra.mxu0 0
        %414 = vmatprep.subr.bf16.mxu0 0
        %415 = vmatpush1.bf16.msra.mxu0 0
        %416 = vmatprep.mubr.bf16.mxu0 0
        %417 = vmatmul.mubr.bf16.gmra.mrb[0].mxu0 %v337
        %v418 = vpop.f32.mrb[0].mxu0
        %v419 = vadd.f32 %v241, %v418
        %v420 = vpop.f32.mrb[0].mxu0
        %v421 = vpop.f32.mrb[0].mxu0
        %v422 = vadd.f32 %v241, %v421
        %v423 = vpop.f32.mrb[0].mxu0
        %424 = vmatprep.mubr.bf16.mxu0 0
        %425 = vmatmul.mubr.bf16.gmra.mrb[0].mxu0 %v340
        %v426 = vpop.f32.mrb[0].mxu0
        %v427 = vadd.f32 %v241, %v426
        %v428 = vpop.f32.mrb[0].mxu0
        %v429 = vpop.f32.mrb[0].mxu0
        %v430 = vadd.f32 %v241, %v429
        %v431 = vpop.f32.mrb[0].mxu0
        %432 = vmatprep.mubr.bf16.mxu0 0
        %433 = vmatmul.mubr.bf16.gmra.mrb[0].mxu0 %v343
        %v434 = vpop.f32.mrb[0].mxu0
        %v435 = vadd.f32 %v241, %v434
        %v436 = vpop.f32.mrb[0].mxu0
        %v437 = vpop.f32.mrb[0].mxu0
        %v438 = vadd.f32 %v241, %v437
        %v439 = vpop.f32.mrb[0].mxu0
        %440 = vmatprep.mubr.bf16.mxu0 0
        %441 = vmatmul.mubr.bf16.gmra.mrb[0].mxu0 %v346
        %v442 = vpop.f32.mrb[0].mxu0
        %v443 = vadd.f32 %v241, %v442
        %v444 = vpop.f32.mrb[0].mxu0
        %v445 = vpop.f32.mrb[0].mxu0
        %v446 = vadd.f32 %v241, %v445
        %v447 = vpop.f32.mrb[0].mxu0
        %448 = vmatprep.mubr.bf16.mxu0 0
        %449 = vmatmul.mubr.bf16.gmra.mrb[0].mxu0 %v349
        %v450 = vpop.f32.mrb[0].mxu0
        %v451 = vadd.f32 %v241, %v450
        %v452 = vpop.f32.mrb[0].mxu0
        %v453 = vpop.f32.mrb[0].mxu0
        %v454 = vadd.f32 %v241, %v453
        %v455 = vpop.f32.mrb[0].mxu0
        %456 = vmatprep.mubr.bf16.mxu0 0
        %457 = vmatmul.mubr.bf16.gmra.mrb[0].mxu0 %v352
        %v458 = vpop.f32.mrb[0].mxu0
        %v459 = vadd.f32 %v241, %v458
        %v460 = vpop.f32.mrb[0].mxu0
        %v461 = vpop.f32.mrb[0].mxu0
        %v462 = vadd.f32 %v241, %v461
        %v463 = vpop.f32.mrb[0].mxu0
        %464 = vmatprep.mubr.bf16.mxu0 0
        %465 = vmatmul.mubr.bf16.gmra.mrb[0].mxu0 %v355
        %v466 = vpop.f32.mrb[0].mxu0
        %v467 = vadd.f32 %v241, %v466
        %v468 = vpop.f32.mrb[0].mxu0
        %v469 = vpop.f32.mrb[0].mxu0
        %v470 = vadd.f32 %v241, %v469
        %v471 = vpop.f32.mrb[0].mxu0
        %472 = vmatprep.mubr.bf16.mxu0 0
        %473 = vmatmul.mubr.bf16.gmra.mrb[0].mxu0 %v358
        %v474 = vpop.f32.mrb[0].mxu0
        %v475 = vadd.f32 %v241, %v474
        %v476 = vpop.f32.mrb[0].mxu0
        %v477 = vpop.f32.mrb[0].mxu0
        %v478 = vadd.f32 %v241, %v477
        %v479 = vpop.f32.mrb[0].mxu0
        %480 = vmatprep.mubr.bf16.mxu0 0
        %481 = vmatmul.mubr.bf16.gmra.mrb[0].mxu0 %v361
        %v482 = vpop.f32.mrb[0].mxu0
        %v483 = vadd.f32 %v241, %v482
        %v484 = vpop.f32.mrb[0].mxu0
        %v485 = vpop.f32.mrb[0].mxu0
        %v486 = vadd.f32 %v241, %v485
        %v487 = vpop.f32.mrb[0].mxu0
        %488 = vmatprep.mubr.bf16.mxu0 0
        %489 = vmatmul.mubr.bf16.gmra.mrb[0].mxu0 %v364
        %v490 = vpop.f32.mrb[0].mxu0
        %v491 = vadd.f32 %v241, %v490
        %v492 = vpop.f32.mrb[0].mxu0
        %v493 = vpop.f32.mrb[0].mxu0
        %v494 = vadd.f32 %v241, %v493
        %v495 = vpop.f32.mrb[0].mxu0
        %496 = vmatprep.mubr.bf16.mxu0 0
        %497 = vmatmul.mubr.bf16.gmra.mrb[0].mxu0 %v367
        %v498 = vpop.f32.mrb[0].mxu0
        %v499 = vadd.f32 %v241, %v498
        %v500 = vpop.f32.mrb[0].mxu0
        %v501 = vpop.f32.mrb[0].mxu0
        %v502 = vadd.f32 %v241, %v501
        %v503 = vpop.f32.mrb[0].mxu0
        %504 = vmatprep.mubr.bf16.mxu0 0
        %505 = vmatmul.mubr.bf16.gmra.mrb[0].mxu0 %v370
        %v506 = vpop.f32.mrb[0].mxu0
        %v507 = vadd.f32 %v241, %v506
        %v508 = vpop.f32.mrb[0].mxu0
        %v509 = vpop.f32.mrb[0].mxu0
        %v510 = vadd.f32 %v241, %v509
        %v511 = vpop.f32.mrb[0].mxu0
        %512 = vmatprep.mubr.bf16.mxu0 0
        %513 = vmatmul.mubr.bf16.gmra.mrb[0].mxu0 %v373
        %v514 = vpop.f32.mrb[0].mxu0
        %v515 = vadd.f32 %v241, %v514
        %v516 = vpop.f32.mrb[0].mxu0
        %v517 = vpop.f32.mrb[0].mxu0
        %v518 = vadd.f32 %v241, %v517
        %v519 = vpop.f32.mrb[0].mxu0
        %520 = vmatprep.mubr.bf16.mxu0 0
        %521 = vmatmul.mubr.bf16.gmra.mrb[0].mxu0 %v376
        %v522 = vpop.f32.mrb[0].mxu0
        %v523 = vadd.f32 %v241, %v522
        %v524 = vpop.f32.mrb[0].mxu0
        %v525 = vpop.f32.mrb[0].mxu0
        %v526 = vadd.f32 %v241, %v525
        %v527 = vpop.f32.mrb[0].mxu0
        %528 = vmatprep.mubr.bf16.mxu0 0
        %529 = vmatmul.mubr.bf16.gmra.mrb[0].mxu0 %v379
        %v530 = vpop.f32.mrb[0].mxu0
        %v531 = vadd.f32 %v241, %v530
        %v532 = vpop.f32.mrb[0].mxu0
        %v533 = vpop.f32.mrb[0].mxu0
        %v534 = vadd.f32 %v241, %v533
        %v535 = vpop.f32.mrb[0].mxu0
        %536 = vmatprep.mubr.bf16.mxu0 0
        %537 = vmatmul.mubr.bf16.gmra.mrb[0].mxu0 %v382
        %v538 = vpop.f32.mrb[0].mxu0
        %v539 = vadd.f32 %v241, %v538
        %v540 = vpop.f32.mrb[0].mxu0
        %v541 = vpop.f32.mrb[0].mxu0
        %v542 = vadd.f32 %v241, %v541
        %v543 = vpop.f32.mrb[0].mxu0
        %544 = vdwg.mxu0
        %v545 = vtanh.pop %v419
        %v546 = vtanh.pop %v422
        %v547 = vtanh.pop %v427
        %v548 = vtanh.pop %v430
        %v549 = vtanh.pop %v435
        %v550 = vtanh.pop %v438
        %v551 = vtanh.pop %v443
        %v552 = vtanh.pop %v446
        %v553 = vtanh.pop %v451
        %v554 = vtanh.pop %v454
        %v555 = vtanh.pop %v459
        %v556 = vtanh.pop %v462
        %v557 = vtanh.pop %v467
        %v558 = vtanh.pop %v470
        %v559 = vtanh.pop %v475
        %v560 = vtanh.pop %v478
        %v561 = vtanh.pop %v483
        %v562 = vtanh.pop %v486
        %v563 = vtanh.pop %v491
        %v564 = vtanh.pop %v494
        %v565 = vtanh.pop %v499
        %v566 = vtanh.pop %v502
        %v567 = vtanh.pop %v507
        %v568 = vtanh.pop %v510
        %v569 = vtanh.pop %v515
        %v570 = vtanh.pop %v518
        %v571 = vtanh.pop %v523
        %v572 = vtanh.pop %v526
        %v573 = vtanh.pop %v531
        %v574 = vtanh.pop %v534
        %v575 = vtanh.pop %v539
        %v576 = vtanh.pop %v542
        %577 = vxpose.xlu0.b32.start [1/16] %v545, 128
        %578 = vxpose.xlu0.b32.cont [2/16] %v546, 128
        %579 = vxpose.xlu0.b32.cont [3/16] %v547, 128
        %580 = vxpose.xlu0.b32.cont [4/16] %v548, 128
        %581 = vxpose.xlu0.b32.cont [5/16] %v549, 128
        %582 = vxpose.xlu0.b32.cont [6/16] %v550, 128
        %583 = vxpose.xlu0.b32.cont [7/16] %v551, 128
        %584 = vxpose.xlu0.b32.cont [8/16] %v552, 128
        %585 = vxpose.xlu0.b32.cont [9/16] %v553, 128
        %586 = vxpose.xlu0.b32.cont [10/16] %v554, 128
        %587 = vxpose.xlu0.b32.cont [11/16] %v555, 128
        %588 = vxpose.xlu0.b32.cont [12/16] %v556, 128
        %589 = vxpose.xlu0.b32.cont [13/16] %v557, 128
        %590 = vxpose.xlu0.b32.cont [14/16] %v558, 128
        %591 = vxpose.xlu0.b32.cont [15/16] %v559, 128
        %592 = vxpose.xlu0.b32.end [16/16] %v560, 128
        %v593 = vpop.trf.xlu0
        %v594 = vpop.trf.xlu0
        %v595 = vpop.trf.xlu0
        %v596 = vpop.trf.xlu0
        %v597 = vpop.trf.xlu0
        %v598 = vpop.trf.xlu0
        %v599 = vpop.trf.xlu0
        %v600 = vpop.trf.xlu0
        %v601 = vpop.trf.xlu0
        %v602 = vpop.trf.xlu0
        %v603 = vpop.trf.xlu0
        %v604 = vpop.trf.xlu0
        %v605 = vpop.trf.xlu0
        %v606 = vpop.trf.xlu0
        %v607 = vpop.trf.xlu0
        %v608 = vpop.trf.xlu0
        %609 = vxpose.xlu0.b32.start [1/16] %v561, 128
        %610 = vxpose.xlu0.b32.cont [2/16] %v562, 128
        %611 = vxpose.xlu0.b32.cont [3/16] %v563, 128
        %612 = vxpose.xlu0.b32.cont [4/16] %v564, 128
        %613 = vxpose.xlu0.b32.cont [5/16] %v565, 128
        %614 = vxpose.xlu0.b32.cont [6/16] %v566, 128
        %615 = vxpose.xlu0.b32.cont [7/16] %v567, 128
        %616 = vxpose.xlu0.b32.cont [8/16] %v568, 128
        %617 = vxpose.xlu0.b32.cont [9/16] %v569, 128
        %618 = vxpose.xlu0.b32.cont [10/16] %v570, 128
        %619 = vxpose.xlu0.b32.cont [11/16] %v571, 128
        %620 = vxpose.xlu0.b32.cont [12/16] %v572, 128
        %621 = vxpose.xlu0.b32.cont [13/16] %v573, 128
        %622 = vxpose.xlu0.b32.cont [14/16] %v574, 128
        %623 = vxpose.xlu0.b32.cont [15/16] %v575, 128
        %624 = vxpose.xlu0.b32.end [16/16] %v576, 128
        %v625 = vpop.trf.xlu0
        %v626 = vpop.trf.xlu0
        %v627 = vpop.trf.xlu0
        %v628 = vpop.trf.xlu0
        %v629 = vpop.trf.xlu0
        %v630 = vpop.trf.xlu0
        %v631 = vpop.trf.xlu0
        %v632 = vpop.trf.xlu0
        %v633 = vpop.trf.xlu0
        %v634 = vpop.trf.xlu0
        %v635 = vpop.trf.xlu0
        %v636 = vpop.trf.xlu0
        %v637 = vpop.trf.xlu0
        %v638 = vpop.trf.xlu0
        %v639 = vpop.trf.xlu0
        %v640 = vpop.trf.xlu0
        %v641 = vld [vmem:[%s3] sm:$0xff]
        %643 = vset.pattern.permute.xlu0 0
        %644 = vperm.xlu0 %643, %v641
        %v645 = vpop.permute.xlu0 %644
        %v647 = vmul.f32 %v593, %v645
        %v648 = vmul.f32 %v625, %v645
        %v649 = vrot.slane %v647, 4
        %v650 = vadd.f32 %v647, %v649
        %v651 = vrot.slane %v650, 2
        %v652 = vadd.f32 %v650, %v651
        %v653 = vrot.slane %v652, 1
        %v654 = vadd.f32 %v652, %v653
        %v655 = vrot.slane %v648, 4
        %v656 = vadd.f32 %v648, %v655
        %v657 = vrot.slane %v656, 2
        %v658 = vadd.f32 %v656, %v657
        %v659 = vrot.slane %v658, 1
        %v660 = vadd.f32 %v658, %v659
        %v663 = vcombine.low %v654, %v660
        %v665 = vunpack.c.l.s4 1966171168
        %v666 = vunpack.c.0.s8 %v665
        %v667 = vlaneseq
        %v668 = vshrl.u32 %v667, 7
        %v669 = vsub.s32 %v666, %v668
        %v670 = vrot.slane %v663, %v669
        %v672 = vunpack.c.l.s4 1966171168
        %v673 = vunpack.c.0.s8 %v672
        %v674 = vlaneseq
        %v675 = vshrl.u32 %v674, 7
        %v676 = vsub.s32 %v673, %v675
        %v677 = vrot.slane %v670, %v676
        %v679 = vlaneseq
        %vm680 = vcmp.ge.s32.totalorder %v679, 0
        %vm681 = vcmp.lt.s32.totalorder %v679, 256
        %vm682 = vmand %vm680, %vm681
        %683 = vst.msk [vmem:[%s191] sm:$0x3] %vm682, %v677
        %s684 = sand.u32 %s115, 1
        %s685 = scalar_lea.sflag [#allocation3], %s684
        %s686 = sand.u32 %s115, 1
        %s687 = smul.addr %s686, 2
        %s688 = scalar_lea.vmem [#allocation2], %s687
        // Predicated region
        $region37: #{tpu_custom_call.1} parent=35 // pred_check
          %p689 = pneg %p125
        $region38: #{tpu_custom_call.1} parent=35 // pred_check_branch
          %691 = sbr.rel (%p689) target = $region40
        $region39: #{tpu_custom_call.1} parent=35 // pred_region
          %s692 = smul.u32 2, %s18
          %s694 = ssub.s32 32, 32
          %695 = vsyncadd %s685, %s694
          %s696 = smul.addr %s692, 16
          %s697 = scalar_lea.hbm %s4, %s696
          %s699 = sshll.u32 %s688, 4
          %s700 = int_to_ptr.vmem [resolvable:$true] %s699
          %702 = dma.vmem_to_hbm [thread:$0]  %s700, 32, %s697, %s685
        $region40: #{tpu_custom_call.1} parent=35 // pred_fallthru
          _
      $region36: #{tpu_custom_call.1} parent=5 // pred_fallthru
        _
      %p703 = scmp.le.s32.totalorder 2, %s13
      // Predicated region
      $region41: #{tpu_custom_call.1} parent=5 // pred_check
        %p704 = pneg %p703
      $region42: #{tpu_custom_call.1} parent=5 // pred_check_branch
        %706 = sbr.rel (%p704) target = $region44
      $region43: #{tpu_custom_call.1} parent=5 // pred_region
        %s707 = ssub.s32 %s13, 2
        // Predicated region
        $region45: #{tpu_custom_call.1} parent=43 // pred_check
          %p708 = pneg %p131
        $region46: #{tpu_custom_call.1} parent=43 // pred_check_branch
          %710 = sbr.rel (%p708) target = $region48
        $region47: #{tpu_custom_call.1} parent=43 // pred_region
          %s711 = sand.u32 %s116, 1
          %s712 = scalar_lea.sflag [#allocation3], %s711
          %s713 = sand.u32 %s116, 1
          %s714 = smul.addr %s713, 2
          %s715 = scalar_lea.vmem [#allocation2], %s714
          %716 = dma.done %s712, 32
        $region48: #{tpu_custom_call.1} parent=43 // pred_fallthru
          _
      $region44: #{tpu_custom_call.1} parent=5 // pred_fallthru
        _
    $region6: #{tpu_custom_call.1} parent=1 // loop_footer
      %s17 = sadd.s32 1, %s13
    $region7: #{tpu_custom_call.1} parent=1 // loop_footer_branch
      %12 = sbr.rel target = $region3
    $region8: #{tpu_custom_call.1} parent=1 // loop_exit
      _
    %717 = vsyncpa [#allocation3], 1
    %s718 = scalar_lea.sflag [#allocation3], 1
    %719 = vsyncpa %s718, 1

</llo_original>
